<compile_context>
chip_gen: v6e
topology: v6e:2x2x1
jax: 0.10.0
libtpu: 0.0.40
codegen_flags: <defaults>
</compile_context>

<pallas_src>
import jax
import jax.numpy as jnp
from jax import lax
from jax.experimental import pallas as pl
from jax.experimental.pallas import tpu as pltpu

LANES = 128
SUBLANES = 8
ROW_ALIGN = 16                 # covers f32 (8-row) and bf16 (16-row packed) tiling
CHUNK_ROWS = 256               # in-kernel slab (128 KiB f32): keeps temporaries small
MAX_TILE_BYTES = 4 << 20       # per-input tile target: 4 MiB (x2 inputs x2 buffers = 16 MiB)
VMEM_LIMIT_BYTES = 48 << 20    # > v5e's 16 MiB default scoped limit, < v7x's 64 MiB physical


def _round_up(x: int, m: int) -> int:
    return ((x + m - 1) // m) * m


def _cdiv(a: int, b: int) -> int:
    return -(-a // b)


def _make_sse_kernel(tile_rows: int, valid_rows: int, needs_mask: bool):
    """Kernel computing an (8,128) SSE partial for one (tile_rows,128) tile."""
    # Static chunk boundaries inside a tile (sizes are multiples of 16 -> 8-aligned).
    bounds = []
    r = 0
    while r < tile_rows:
        size = min(CHUNK_ROWS, tile_rows - r)
        bounds.append((r, size))
        r += size

    def kernel(pred_ref, h_ref, out_ref):
        base = pl.program_id(0) * tile_rows
        acc = jnp.zeros((SUBLANES, LANES), jnp.float32)
        for start, size in bounds:
            # Upcast in-kernel (no-op for f32; halves HBM traffic for bf16 inputs).
            p = pred_ref[start:start + size, :].astype(jnp.float32)
            h = h_ref[start:start + size, :].astype(jnp.float32)
            d = p - h
            d2 = d * d
            if needs_mask:
                # Garbage rows only exist in the (partial) last edge block; the
                # global-row comparison is correct (and cheap VPU work) everywhere.
                row = lax.broadcasted_iota(jnp.int32, (size, LANES), 0) + (base + start)
                d2 = jnp.where(row < valid_rows, d2, 0.0)
            # (size,128) -> (size//8, 8, 128): vreg-wise adds (pure VPU, no XLU).
            acc = acc + jnp.sum(d2.reshape(size // SUBLANES, SUBLANES, LANES), axis=0)
        out_ref[...] = acc.reshape(1, SUBLANES, LANES)

    return kernel


@jax.jit
def pinn_loss(prediction: jax.Array, h_data: jax.Array) -> jax.Array:
    """Returns sum((prediction - h_data)**2) as a scalar (f32)."""
    assert prediction.shape == h_data.shape

    pred_flat = prediction.reshape(-1)
    h_flat = h_data.reshape(-1)
    total = pred_flat.size

    rows = total // LANES            # number of full 128-lane rows
    tail = total - rows * LANES      # < 128 ragged trailing elements

    if rows < ROW_ALIGN:
        # Tiny input: kernel launch overhead dominates; plain JAX is exact.
        d = pred_flat.astype(jnp.float32) - h_flat.astype(jnp.float32)
        return jnp.sum(d * d)

    tail_sse = jnp.float32(0.0)
    if tail:
        # Ragged tail handled outside the kernel -> no whole-array pad/copy.
        pt = pred_flat[rows * LANES:].astype(jnp.float32)
        ht = h_flat[rows * LANES:].astype(jnp.float32)
        tail_sse = jnp.sum((pt - ht) * (pt - ht))
        pred_flat = pred_flat[: rows * LANES]
        h_flat = h_flat[: rows * LANES]

    # Free, contiguous reshape to the lane-dense slab.
    pred2d = pred_flat.reshape(rows, LANES)
    h2d = h_flat.reshape(rows, LANES)

    itemsize = jnp.dtype(pred2d.dtype).itemsize
    # Dtype-scaled row cap: constant HBM bytes per grid step (~4 MiB per input).
    cap_rows = max(ROW_ALIGN, (MAX_TILE_BYTES // (LANES * itemsize)) // ROW_ALIGN * ROW_ALIGN)
    if rows <= 2 * cap_rows:
        # Split into (up to) two balanced tiles so both v7x TensorCores get work.
        tile_rows = min(cap_rows, _round_up(_cdiv(rows, 2), ROW_ALIGN))
    else:
        tile_rows = cap_rows
    num_tiles = _cdiv(rows, tile_rows)
    needs_mask = (rows % tile_rows) != 0   # last edge block is partial -> mask garbage

    kernel = _make_sse_kernel(tile_rows, rows, needs_mask)

    partials = pl.pallas_call(
        kernel,
        out_shape=jax.ShapeDtypeStruct((num_tiles, SUBLANES, LANES), jnp.float32),
        grid_spec=pltpu.PrefetchScalarGridSpec(
            num_scalar_prefetch=0,
            grid=(num_tiles,),
            in_specs=[
                pl.BlockSpec((tile_rows, LANES), lambda i: (i, 0)),
                pl.BlockSpec((tile_rows, LANES), lambda i: (i, 0)),
            ],
            out_specs=pl.BlockSpec((1, SUBLANES, LANES), lambda i: (i, 0, 0)),
        ),
        compiler_params=pltpu.CompilerParams(
            # Each grid step writes its own output block -> safe to shard across
            # v7x's two TensorCores; harmless on v5e/v6e.
            dimension_semantics=("parallel",),
            vmem_limit_bytes=VMEM_LIMIT_BYTES,
        ),
        cost_estimate=pl.CostEstimate(
            flops=3 * rows * LANES,
            transcendentals=0,
            bytes_accessed=2 * rows * LANES * itemsize
            + num_tiles * SUBLANES * LANES * 4,
        ),
    )(pred2d, h2d)

    # Tiny final reduction (num_tiles x 8 x 128 f32), fused by XLA under jit.
    return jnp.sum(partials) + tail_sse


if __name__ == "__main__":
    key = jax.random.PRNGKey(0)
    k1, k2 = jax.random.split(key)

    # Small NCHW shapes consistent with a PINN field prediction / target pair.
    shape = (2, 4, 16, 16)
    prediction = jax.random.normal(k1, shape, dtype=jnp.float32)
    h_data = jax.random.normal(k2, shape, dtype=jnp.float32)

    loss = jax.block_until_ready(pinn_loss(prediction, h_data))
    ref = jnp.sum((prediction - h_data) ** 2)
    assert jnp.allclose(loss, ref, rtol=1e-5, atol=1e-5), (loss, ref)

    # Non-128-divisible shape: exercises the masked edge block + ragged tail.
    shape2 = (3, 5, 17, 13)
    p2 = jax.random.normal(k1, shape2, dtype=jnp.float32)
    h2 = jax.random.normal(k2, shape2, dtype=jnp.float32)
    loss2 = jax.block_until_ready(pinn_loss(p2, h2))
    ref2 = jnp.sum((p2 - h2) ** 2)
    assert jnp.allclose(loss2, ref2, rtol=1e-5, atol=1e-5), (loss2, ref2)

    # bf16 inputs: streamed in native dtype, upcast in-kernel.
    p3 = prediction.astype(jnp.bfloat16)
    h3 = h_data.astype(jnp.bfloat16)
    loss3 = jax.block_until_ready(pinn_loss(p3, h3))
    ref3 = jnp.sum((p3.astype(jnp.float32) - h3.astype(jnp.float32)) ** 2)
    assert jnp.allclose(loss3, ref3, rtol=1e-3, atol=1e-3), (loss3, ref3)

    print("KERNEL_OK")
</pallas_src>

<mosaic_0001>
module attributes {stable_mosaic.version = 11 : i64} {
  func.func @kernel(%arg0: i32, %arg1: memref<16x128xf32, #tpu.memory_space<vmem>>, %arg2: memref<16x128xf32, #tpu.memory_space<vmem>>, %arg3: memref<1x8x128xf32, #tpu.memory_space<vmem>>) attributes {dimension_semantics = [#tpu.dimension_semantics<parallel>], iteration_bounds = array<i64: 1>, scalar_prefetch = 0 : i64, scratch_operands = 0 : i64, tpu.core_type = #tpu.core_type<tc>, window_params = [{transform_indices = @transform_0, window_bounds = array<i64: 16, 128>}, {transform_indices = @transform_1, window_bounds = array<i64: 16, 128>}, {transform_indices = @transform_2, window_bounds = array<i64: 1, 8, 128>}]} {
    %cst = arith.constant 0.000000e+00 : f32
    %0 = vector.broadcast %cst : f32 to vector<8x128xf32>
    %c0 = arith.constant 0 : index
    %c0_0 = arith.constant 0 : index
    %1 = vector.load %arg1[%c0, %c0_0] : memref<16x128xf32, #tpu.memory_space<vmem>>, vector<16x128xf32>
    %c0_1 = arith.constant 0 : index
    %c0_2 = arith.constant 0 : index
    %2 = vector.load %arg2[%c0_1, %c0_2] : memref<16x128xf32, #tpu.memory_space<vmem>>, vector<16x128xf32>
    %3 = arith.subf %1, %2 : vector<16x128xf32>
    %4 = arith.mulf %3, %3 : vector<16x128xf32>
    %5 = vector.shape_cast %4 : vector<16x128xf32> to vector<2x8x128xf32>
    %cst_3 = arith.constant dense<0.000000e+00> : vector<8x128xf32>
    %6 = vector.multi_reduction <add>, %5, %cst_3 [0] : vector<2x8x128xf32> to vector<8x128xf32>
    %7 = arith.addf %0, %6 : vector<8x128xf32>
    %8 = vector.shape_cast %7 : vector<8x128xf32> to vector<1x8x128xf32>
    %c0_4 = arith.constant 0 : index
    %c0_5 = arith.constant 0 : index
    %c0_6 = arith.constant 0 : index
    %9 = vector.load %arg3[%c0_4, %c0_5, %c0_6] : memref<1x8x128xf32, #tpu.memory_space<vmem>>, vector<1x8x128xf32>
    tpu.vector_store %arg3[%c0_4, %c0_5, %c0_6], %8 {strides = array<i32>} : memref<1x8x128xf32, #tpu.memory_space<vmem>>, vector<1x8x128xf32>,
    return
  }
  func.func @transform_0(%arg0: i32) -> (i32, i32) {
    %c0_i32 = arith.constant 0 : i32
    %c0_i32_0 = arith.constant 0 : i32
    return %arg0, %c0_i32 : i32, i32
  }
  func.func @transform_1(%arg0: i32) -> (i32, i32) {
    %c0_i32 = arith.constant 0 : i32
    %c0_i32_0 = arith.constant 0 : i32
    return %arg0, %c0_i32 : i32, i32
  }
  func.func @transform_2(%arg0: i32) -> (i32, i32, i32) {
    %c0_i32 = arith.constant 0 : i32
    %c0_i32_0 = arith.constant 0 : i32
    %c0_i32_1 = arith.constant 0 : i32
    return %arg0, %c0_i32, %c0_i32_0 : i32, i32, i32
  }
}

</mosaic_0001>

<llo_original>
// kernel: pinn_loss.1
$region0: #{pinn_loss.1}
  #allocation0 [shape = 'u32[]', space=smem, size = 0x4, offset = 0x4, fixed_abs, tag = 'smem constant byte address 0x4 - core index']
  #allocation1 [shape = 'u32[144,128]{1,0:T(1,128)}', space=vmem, size = 0x12000, scoped, tag = 'internal scratch']
  %s0 = inlined_call_operand.vmem [shape: f32[16,128], index: 0, kind: input, shape index: {}]
  %s1 = inlined_call_operand.vmem [shape: f32[16,128], index: 1, kind: input, shape index: {}]
  %s2 = inlined_call_operand.vmem [shape: f32[1,8,128], index: 2, kind: output, shape index: {}]
  %s3 = sld [smem:[#allocation0]]
  $region18: #{pinn_loss.1} parent=0
    _
  %s5 = ssub.s32 1, %s3
  %s6 = scalar_select 0, %s5, %s3
  // Predicated region
  $region2: #{pinn_loss.1} parent=0 // pred_check
    _
  $region3: #{pinn_loss.1} parent=0 // pred_check_branch
    %8 = sbr.rel (0) target = $region5
  $region4: #{pinn_loss.1} parent=0 // pred_region
    _
  $region5: #{pinn_loss.1} parent=0 // pred_fallthru
    _
  // Predicated region
  $region6: #{pinn_loss.1} parent=0 // pred_check
    _
  $region7: #{pinn_loss.1} parent=0 // pred_check_branch
    %10 = sbr.rel (0) target = $region9
  $region8: #{pinn_loss.1} parent=0 // pred_region
    _
  $region9: #{pinn_loss.1} parent=0 // pred_fallthru
    _
  %v11 = vld [vmem:[%s0] sm:$0xff]
  %v12 = vld [vmem:[%s0 + $0x8] sm:$0xff]
  %v13 = vld [vmem:[%s1] sm:$0xff]
  %v14 = vld [vmem:[%s1 + $0x8] sm:$0xff]
  %v15 = vsub.f32 %v11, %v13
  %v16 = vsub.f32 %v12, %v14
  %v17 = vmul.f32 %v15, %v15
  %v18 = vmul.f32 %v16, %v16
  %v19 = vadd.f32 %v17, %v18
  %v20 = vadd.f32 %v19, 0.0
  %21 = vst [vmem:[%s2] sm:$0xff] %v20
  // Predicated region
  $region10: #{pinn_loss.1} parent=0 // pred_check
    _
  $region11: #{pinn_loss.1} parent=0 // pred_check_branch
    %23 = sbr.rel (0) target = $region13
  $region12: #{pinn_loss.1} parent=0 // pred_region
    _
  $region13: #{pinn_loss.1} parent=0 // pred_fallthru
    _
  // Predicated region
  $region14: #{pinn_loss.1} parent=0 // pred_check
    _
  $region15: #{pinn_loss.1} parent=0 // pred_check_branch
    %25 = sbr.rel (0) target = $region17
  $region16: #{pinn_loss.1} parent=0 // pred_region
    _
  $region17: #{pinn_loss.1} parent=0 // pred_fallthru
    _

</llo_original>
